<compile_context>
chip_gen: v7x
topology: tpu7x:2x2x1
jax: 0.10.0
libtpu: 0.0.40
codegen_flags: <defaults>
</compile_context>

<pallas_src>
import functools

import jax
import jax.numpy as jnp
from jax.experimental import pallas as pl
from jax.experimental.pallas import tpu as pltpu

LANES = 128

# ----------------------------------------------------------------------------
# Static circuit definition (stand-in for the JSON file in the PyTorch module).
# ----------------------------------------------------------------------------
CIRCUIT = {
    "inputs": ["a", "b", "c", "d"],
    "gates": [
        {"id": "g1", "type": "AND", "inputs": ["a", "b"]},
        {"id": "g2", "type": "OR", "inputs": ["c", "d"]},
        {"id": "g3", "type": "AND", "inputs": ["g1", "g2", "b"]},
        {"id": "g4", "type": "OR", "inputs": ["g3", "a", "d"]},
    ],
    "output": "g4",
}


# ----------------------------------------------------------------------------
# Helpers: tiling choices.
# ----------------------------------------------------------------------------
def _round_up(n, m):
    return ((n + m - 1) // m) * m


def _sublane_multiple(dtype):
    """Required second-to-last block-dim multiple for packed dtypes."""
    itemsize = jnp.dtype(dtype).itemsize
    return max(8, 32 // itemsize)  # f32 -> 8, bf16 -> 16, int8 -> 32


def _pick_tile_rows(n_in, dtype):
    """Largest tile that keeps double-buffered blocks inside scoped VMEM."""
    itemsize = jnp.dtype(dtype).itemsize
    sub = _sublane_multiple(dtype)
    # double-buffered: (n_in input rows + 1 output row) per tile row.
    bytes_per_row = 2 * (n_in + 1) * LANES * itemsize
    kind = ""
    try:
        kind = jax.devices()[0].device_kind.lower()
    except Exception:  # pragma: no cover - CPU fallback / odd runtimes
        pass
    if any(v in kind for v in ("v2", "v3", "v4", "v5")):
        budget = 12 << 20  # stay under the 16 MiB default scoped VMEM (v5e)
    else:
        budget = 24 << 20  # v6e / v7x: 32 MiB default scoped VMEM
    tile = budget // bytes_per_row
    tile = max(sub, (tile // sub) * sub)
    return min(tile, 4096)


def _choose_grid_tile(rows, tile_rows, sub):
    """Clamp tile to the batch; keep >=2 grid steps when there is enough work
    so dimension_semantics=("parallel",) shards across v7x's two TensorCores."""
    tile_rows = max(sub, (tile_rows // sub) * sub)
    if rows <= sub:
        return max(rows, 1)  # single tiny step; block dim == full (padded) dim
    if rows <= 2 * tile_rows:
        return _round_up(pl.cdiv(rows, 2), sub)
    return tile_rows


def _divisor_tile(rows_padded, tile_rows, sub):
    """Make sure the tile evenly divides the padded row count."""
    if tile_rows >= 1 and rows_padded % tile_rows == 0:
        return tile_rows
    t = (tile_rows // sub) * sub
    while t >= sub:
        if rows_padded % t == 0:
            return t
        t -= sub
    return rows_padded  # single full-extent block


# ----------------------------------------------------------------------------
# Kernel.
# ----------------------------------------------------------------------------
def make_logic_circuit_kernel(circuit):
    """Pallas kernel evaluating `circuit` on an (n_in, tile_rows, 128) block."""
    inputs = circuit["inputs"]
    gates = circuit["gates"]
    output = circuit["output"]

    def kernel(x_ref, o_ref):
        # x_ref: (n_in, tile_rows, 128), o_ref: (tile_rows, 128).
        # Compute in f32 regardless of the streamed dtype (matches torch
        # prod/max semantics; upcast is free VALU filler on a mem-bound kernel).
        values = {
            name: x_ref[i].astype(jnp.float32) for i, name in enumerate(inputs)
        }
        for gate in gates:
            cols = [values[inp] for inp in gate["inputs"]]
            if gate["type"] == "AND":
                v = functools.reduce(lambda a, b: a * b, cols)
            elif gate["type"] == "OR":
                v = functools.reduce(jnp.maximum, cols)
            else:
                raise ValueError(f"unknown gate type {gate['type']}")
            values[gate["id"]] = v
        o_ref[...] = values[output].astype(o_ref.dtype)

    return kernel


# ----------------------------------------------------------------------------
# Canonical-format path: producer-side packing + packed forward.
# ----------------------------------------------------------------------------
def pack_inputs(x, circuit=CIRCUIT, tile_rows=None):
    """One-time re-layout (batch, n_in) -> (n_in, rows_padded, 128).

    Producers that can emit this layout directly (or cache it across many
    circuit evaluations) should do so and call `logic_circuit_forward_packed`,
    avoiding an extra HBM pass entirely.
    Returns (xt, tile_rows).
    """
    batch, n_in = x.shape
    assert n_in == len(circuit["inputs"])
    sub = _sublane_multiple(x.dtype)
    rows = pl.cdiv(batch, LANES)
    if tile_rows is None:
        tile_rows = _pick_tile_rows(n_in, x.dtype)
    tile_rows = _choose_grid_tile(rows, tile_rows, sub)
    rows_padded = tile_rows * pl.cdiv(rows, tile_rows)

    xt = jnp.swapaxes(x, 0, 1)  # (n_in, batch)
    pad = rows_padded * LANES - batch
    if pad:
        xt = jnp.pad(xt, ((0, 0), (0, pad)))
    return xt.reshape(n_in, rows_padded, LANES), tile_rows


def logic_circuit_forward_packed(xt, batch, circuit=CIRCUIT, tile_rows=None,
                                 input_buffering=None):
    """xt: (n_in, rows_padded, 128) canonical layout -> (batch, 1)."""
    n_in, rows_padded, lanes = xt.shape
    assert lanes == LANES
    assert n_in == len(circuit["inputs"])
    sub = _sublane_multiple(xt.dtype)

    if tile_rows is None:
        tile_rows = _choose_grid_tile(
            rows_padded, _pick_tile_rows(n_in, xt.dtype), sub)
    tile_rows = _divisor_tile(rows_padded, tile_rows, sub)
    grid = rows_padded // tile_rows

    in_spec_kwargs = {}
    if input_buffering is not None:
        # Optional: deeper input pipelining if xprof shows exposed input DMA.
        in_spec_kwargs["pipeline_mode"] = pl.Buffered(input_buffering)

    kernel = make_logic_circuit_kernel(circuit)
    out = pl.pallas_call(
        kernel,
        out_shape=jax.ShapeDtypeStruct((rows_padded, LANES), xt.dtype),
        grid_spec=pl.GridSpec(
            grid=(grid,),
            in_specs=[
                pl.BlockSpec((n_in, tile_rows, LANES), lambda i: (0, i, 0),
                             **in_spec_kwargs)
            ],
            out_specs=pl.BlockSpec((tile_rows, LANES), lambda i: (i, 0)),
        ),
        compiler_params=pltpu.CompilerParams(
            dimension_semantics=("parallel",),
            # Let XLA fuse the transpose/pad producer into the input DMA
            # (effective under jit); saves a full HBM read+write pass.
            allow_input_fusion=[True],
        ),
    )(xt)

    # (rows_padded, 128) -> (batch, 1); batch index b lives at (b//128, b%128).
    return out.reshape(rows_padded * LANES, 1)[:batch]


def logic_circuit_forward(x, circuit=CIRCUIT, tile_rows=None):
    """Convenience path: x (batch, n_in) -> (batch, 1)."""
    batch = x.shape[0]
    xt, tile_rows = pack_inputs(x, circuit=circuit, tile_rows=tile_rows)
    return logic_circuit_forward_packed(xt, batch, circuit=circuit,
                                        tile_rows=tile_rows)


# ----------------------------------------------------------------------------
# Plain-JAX reference mirroring the PyTorch module semantics.
# ----------------------------------------------------------------------------
def logic_circuit_reference(x, circuit=CIRCUIT):
    xf = x.astype(jnp.float32)
    values = {name: xf[:, i:i + 1] for i, name in enumerate(circuit["inputs"])}
    for gate in circuit["gates"]:
        gi = jnp.concatenate([values[inp] for inp in gate["inputs"]], axis=1)
        if gate["type"] == "AND":
            values[gate["id"]] = jnp.prod(gi, axis=1, keepdims=True)
        else:
            values[gate["id"]] = jnp.max(gi, axis=1, keepdims=True)
    return values[circuit["output"]].astype(x.dtype)


if __name__ == "__main__":
    n_in = len(CIRCUIT["inputs"])
    fwd = jax.jit(lambda x: logic_circuit_forward(x))

    # 1) Small deterministic binary-valued inputs (logic levels 0.0 / 1.0).
    key = jax.random.PRNGKey(0)
    batch = 16
    x = jax.random.bernoulli(key, p=0.5, shape=(batch, n_in)).astype(jnp.float32)
    out = jax.block_until_ready(fwd(x))
    ref = logic_circuit_reference(x)
    assert out.shape == (batch, 1)
    assert jnp.allclose(out, ref), (out, ref)

    # 2) Non-multiple-of-128 batch with non-binary floats: exercises padding
    #    and the general prod/max semantics.
    key2 = jax.random.PRNGKey(1)
    batch2 = 272
    x2 = jax.random.uniform(key2, shape=(batch2, n_in), dtype=jnp.float32)
    out2 = jax.block_until_ready(fwd(x2))
    ref2 = logic_circuit_reference(x2)
    assert out2.shape == (batch2, 1)
    assert jnp.allclose(out2, ref2, rtol=1e-6, atol=1e-6)

    # 3) Narrow-dtype (bf16) streamed input via the canonical packed path:
    #    exercises the 2-step parallel grid and packed sublane tiling.
    key3 = jax.random.PRNGKey(2)
    batch3 = 4096
    x3 = jax.random.bernoulli(key3, p=0.5, shape=(batch3, n_in)).astype(jnp.bfloat16)
    xt3, tr3 = pack_inputs(x3)
    out3 = jax.block_until_ready(
        jax.jit(lambda xt: logic_circuit_forward_packed(xt, batch3, tile_rows=tr3))(xt3))
    ref3 = logic_circuit_reference(x3)
    assert out3.shape == (batch3, 1) and out3.dtype == jnp.bfloat16
    assert jnp.array_equal(out3.astype(jnp.float32), ref3.astype(jnp.float32))

    print("KERNEL_OK")
</pallas_src>

<mosaic_0001>
module attributes {stable_mosaic.version = 11 : i64} {
  func.func @kernel(%arg0: i32, %arg1: memref<4x1x128xf32, #tpu.memory_space<vmem>>, %arg2: memref<1x128xf32, #tpu.memory_space<vmem>>) attributes {dimension_semantics = [#tpu.dimension_semantics<parallel>], iteration_bounds = array<i64: 1>, scalar_prefetch = 0 : i64, scratch_operands = 0 : i64, tpu.core_type = #tpu.core_type<tc>, window_params = [{transform_indices = @transform_0, window_bounds = array<i64: 4, 1, 128>}, {transform_indices = @transform_1, window_bounds = array<i64: 1, 128>}]} {
    %c0 = arith.constant 0 : index
    %c0_0 = arith.constant 0 : index
    %c0_1 = arith.constant 0 : index
    %0 = vector.load %arg1[%c0, %c0_0, %c0_1] : memref<4x1x128xf32, #tpu.memory_space<vmem>>, vector<1x1x128xf32>
    %1 = vector.shape_cast %0 : vector<1x1x128xf32> to vector<1x128xf32>
    %c1 = arith.constant 1 : index
    %c0_2 = arith.constant 0 : index
    %c0_3 = arith.constant 0 : index
    %2 = vector.load %arg1[%c1, %c0_2, %c0_3] : memref<4x1x128xf32, #tpu.memory_space<vmem>>, vector<1x1x128xf32>
    %3 = vector.shape_cast %2 : vector<1x1x128xf32> to vector<1x128xf32>
    %c2 = arith.constant 2 : index
    %c0_4 = arith.constant 0 : index
    %c0_5 = arith.constant 0 : index
    %4 = vector.load %arg1[%c2, %c0_4, %c0_5] : memref<4x1x128xf32, #tpu.memory_space<vmem>>, vector<1x1x128xf32>
    %5 = vector.shape_cast %4 : vector<1x1x128xf32> to vector<1x128xf32>
    %c3 = arith.constant 3 : index
    %c0_6 = arith.constant 0 : index
    %c0_7 = arith.constant 0 : index
    %6 = vector.load %arg1[%c3, %c0_6, %c0_7] : memref<4x1x128xf32, #tpu.memory_space<vmem>>, vector<1x1x128xf32>
    %7 = vector.shape_cast %6 : vector<1x1x128xf32> to vector<1x128xf32>
    %8 = arith.mulf %1, %3 : vector<1x128xf32>
    %9 = arith.maximumf %5, %7 : vector<1x128xf32>
    %10 = arith.mulf %8, %9 : vector<1x128xf32>
    %11 = arith.mulf %10, %3 : vector<1x128xf32>
    %12 = arith.maximumf %11, %1 : vector<1x128xf32>
    %13 = arith.maximumf %12, %7 : vector<1x128xf32>
    %c0_8 = arith.constant 0 : index
    %c0_9 = arith.constant 0 : index
    %14 = vector.load %arg2[%c0_8, %c0_9] : memref<1x128xf32, #tpu.memory_space<vmem>>, vector<1x128xf32>
    tpu.vector_store %arg2[%c0_8, %c0_9], %13 {strides = array<i32>} : memref<1x128xf32, #tpu.memory_space<vmem>>, vector<1x128xf32>,
    return
  }
  func.func @transform_0(%arg0: i32) -> (i32, i32, i32) {
    %c0_i32 = arith.constant 0 : i32
    %c0_i32_0 = arith.constant 0 : i32
    %c0_i32_1 = arith.constant 0 : i32
    return %c0_i32, %arg0, %c0_i32_0 : i32, i32, i32
  }
  func.func @transform_1(%arg0: i32) -> (i32, i32) {
    %c0_i32 = arith.constant 0 : i32
    %c0_i32_0 = arith.constant 0 : i32
    return %arg0, %c0_i32 : i32, i32
  }
}

</mosaic_0001>

<llo_original>
// kernel: _lambda_.1
$region0: #{_lambda_.1}
  #allocation0 [shape = 'u32[]', space=smem, size = 0x4, offset = 0x4, fixed_abs, tag = 'smem constant byte address 0x4 - core index']
  #allocation1 [shape = 'u32[144,128]{1,0:T(1,128)}', space=vmem, size = 0x12000, scoped, tag = 'internal scratch']
  %s0 = inlined_call_operand.vmem [shape: f32[4,1,128], index: 0, kind: input, shape index: {}]
  %s1 = inlined_call_operand.vmem [shape: f32[1,128], index: 1, kind: output, shape index: {}]
  %s2 = sld [smem:[#allocation0]]
  $region14: #{_lambda_.1} parent=0
    _
  %s4 = ssub.s32 1, %s2
  %s5 = scalar_select 0, %s4, %s2
  // Predicated region
  $region2: #{_lambda_.1} parent=0 // pred_check
    _
  $region3: #{_lambda_.1} parent=0 // pred_check_branch
    %7 = sbr.rel (0) target = $region5
  $region4: #{_lambda_.1} parent=0 // pred_region
    _
  $region5: #{_lambda_.1} parent=0 // pred_fallthru
    _
  %v8 = vld [vmem:[%s0] sm:$0x1]
  %s9 = scalar_lea.vmem %s0, 1
  %v10 = vld [vmem:[%s9] sm:$0x1]
  %s11 = scalar_lea.vmem %s0, 2
  %v12 = vld [vmem:[%s11] sm:$0x1]
  %s13 = scalar_lea.vmem %s0, 3
  %v14 = vld [vmem:[%s13] sm:$0x1]
  %v15 = vmul.f32 %v8, %v10
  %v16 = vmax.f32 %v12, %v14
  %v17 = vmul.f32 %v15, %v16
  %v18 = vmul.f32 %v17, %v10
  %v19 = vmax.f32 %v18, %v8
  %v20 = vmax.f32 %v19, %v14
  %21 = vst [vmem:[%s1] sm:$0x1] %v20
  // Predicated region
  $region6: #{_lambda_.1} parent=0 // pred_check
    _
  $region7: #{_lambda_.1} parent=0 // pred_check_branch
    %23 = sbr.rel (0) target = $region9
  $region8: #{_lambda_.1} parent=0 // pred_region
    _
  $region9: #{_lambda_.1} parent=0 // pred_fallthru
    _
  // Predicated region
  $region10: #{_lambda_.1} parent=0 // pred_check
    _
  $region11: #{_lambda_.1} parent=0 // pred_check_branch
    %25 = sbr.rel (0) target = $region13
  $region12: #{_lambda_.1} parent=0 // pred_region
    _
  $region13: #{_lambda_.1} parent=0 // pred_fallthru
    _

</llo_original>
